<compile_context>
chip_gen: v7x
topology: tpu7x:2x2x1
jax: 0.10.0
libtpu: 0.0.40
codegen_flags: <defaults>
</compile_context>

<pallas_src>
import functools

import jax
import jax.numpy as jnp
from jax.experimental import pallas as pl
from jax.experimental.pallas import tpu as pltpu

# Logical (PyTorch) layer sizes.
IN_F = 4
HID = 100
OUT_F = 51

# Padded (TPU-friendly) sizes.
IN_PAD = 8      # layer-1 K padded 4 -> 8 (sublane / MXU friendly)
HID_PAD = 128   # lane-dense hidden width (100 -> 128)


def _round_up(n, m):
    return ((n + m - 1) // m) * m


def _mlp_kernel(x_ref, w1_ref, b1_ref, w2_ref, b2_ref, w3_ref, b3_ref, o_ref):
    """One batch tile: fused 3-layer MLP; all intermediates stay in VMEM."""
    # Layer 1 on the MXU (K padded 4->8).  At the enlarged batch tile the old
    # VPU broadcast-FMA path saturates the VALU slots on v6e/v7x while the MXU
    # has large slack, so this tiny-K matmul is effectively free.
    h1 = jnp.dot(x_ref[...].astype(jnp.bfloat16), w1_ref[...],
                 preferred_element_type=jnp.float32) + b1_ref[...]
    h1 = jnp.maximum(h1, 0.0)                               # (TB, 128) f32

    # Layer 2: bf16 operands on the MXU, f32 accumulation, f32 bias/ReLU (VPU).
    h2 = jnp.dot(h1.astype(jnp.bfloat16), w2_ref[...],
                 preferred_element_type=jnp.float32) + b2_ref[...]
    h2 = jnp.maximum(h2, 0.0)                               # (TB, 128) f32

    # Layer 3: bf16 operands, f32 accumulation; w3 is zero-padded only along K,
    # so the result is 51-wide directly (no post-slice needed).
    out = jnp.dot(h2.astype(jnp.bfloat16), w3_ref[...],
                  preferred_element_type=jnp.float32) + b3_ref[...]
    # Output kept f32 (module semantics).  bf16 here would halve the dominant
    # HBM write stream if the downstream consumer tolerated it.
    o_ref[...] = out.astype(o_ref.dtype)                    # (TB, 51)


@functools.partial(jax.jit, static_argnames=("block_b",))
def mlp_forward(x, padded_params, *, block_b=8192):
    """x: (B, 4) float32 -> (B, 51) float32."""
    w1, b1, w2, b2, w3, b3 = padded_params
    B = x.shape[0]
    assert x.shape[1] == IN_F, x.shape

    # --- batch tiling --------------------------------------------------------
    b8 = _round_up(B, 8)
    if b8 >= 16:
        # Keep >= 2 grid steps when the batch allows it (v7x megacore sharding
        # of the "parallel" axis), but never more than block_b rows per step
        # (VMEM budget: ~20-30 MiB of blocks + temporaries at 8192 rows).
        tb = min(block_b, _round_up(b8 // 2, 8))
    else:
        tb = b8
    b_pad = _round_up(B, tb)

    # Pad batch to a whole number of tiles and the K=4 input to K=8.  Padded
    # input columns hit zero rows of w1; padded batch rows are sliced off.
    x = jnp.pad(x, ((0, b_pad - B), (0, IN_PAD - IN_F)))
    grid = (b_pad // tb,)

    # Weights/biases: same block every step -> stay VMEM-resident across steps.
    const = lambda i: (0, 0)

    out = pl.pallas_call(
        _mlp_kernel,
        out_shape=jax.ShapeDtypeStruct((b_pad, OUT_F), jnp.float32),
        grid=grid,
        in_specs=[
            pl.BlockSpec((tb, IN_PAD), lambda i: (i, 0)),      # x (streamed)
            pl.BlockSpec((IN_PAD, HID_PAD), const),            # w1 bf16
            pl.BlockSpec((1, HID_PAD), const),                 # b1 f32
            pl.BlockSpec((HID_PAD, HID_PAD), const),           # w2 bf16
            pl.BlockSpec((1, HID_PAD), const),                 # b2 f32
            pl.BlockSpec((HID_PAD, OUT_F), const),             # w3 bf16
            pl.BlockSpec((1, OUT_F), const),                   # b3 f32
        ],
        out_specs=pl.BlockSpec((tb, OUT_F), lambda i: (i, 0)),
        compiler_params=pltpu.CompilerParams(
            dimension_semantics=("parallel",),                 # v7x megacore
            vmem_limit_bytes=48 * 1024 * 1024),                # fits TB=8192 on v5e/v6e/v7x
    )(x, w1, b1, w2, b2, w3, b3)

    return out[:B] if b_pad != B else out


def init_params(key):
    """Logical (PyTorch-shaped) params: W as (in, out), b as (out,)."""
    ks = jax.random.split(key, 6)

    def linear(kw, kb, fan_in, fan_out):
        bound = 1.0 / jnp.sqrt(jnp.float32(fan_in))
        w = jax.random.uniform(kw, (fan_in, fan_out), jnp.float32, -bound, bound)
        b = jax.random.uniform(kb, (fan_out,), jnp.float32, -bound, bound)
        return w, b

    w1, b1 = linear(ks[0], ks[1], IN_F, HID)    # hidden1
    w2, b2 = linear(ks[2], ks[3], HID, HID)     # hidden3 (used as "hidden2")
    w3, b3 = linear(ks[4], ks[5], HID, OUT_F)   # predict
    return (w1, b1, w2, b2, w3, b3)


def prepare_params(params):
    """Zero-pad to lane/sublane-dense shapes; cast matmul weights to bf16."""
    w1, b1, w2, b2, w3, b3 = params
    w1p = jnp.zeros((IN_PAD, HID_PAD), jnp.float32).at[:IN_F, :HID].set(w1)
    b1p = jnp.zeros((1, HID_PAD), jnp.float32).at[:, :HID].set(b1)
    w2p = jnp.zeros((HID_PAD, HID_PAD), jnp.float32).at[:HID, :HID].set(w2)
    b2p = jnp.zeros((1, HID_PAD), jnp.float32).at[:, :HID].set(b2)
    w3p = jnp.zeros((HID_PAD, OUT_F), jnp.float32).at[:HID, :].set(w3)
    b3p = b3.reshape(1, OUT_F).astype(jnp.float32)
    return (w1p.astype(jnp.bfloat16), b1p,
            w2p.astype(jnp.bfloat16), b2p,
            w3p.astype(jnp.bfloat16), b3p)


def mlp_ref(x, params, *, bf16_dots=False):
    """Pure-JAX reference. bf16_dots=True mirrors the kernel's numerics."""
    w1, b1, w2, b2, w3, b3 = params
    if bf16_dots:
        h1 = jnp.dot(x.astype(jnp.bfloat16), w1.astype(jnp.bfloat16),
                     preferred_element_type=jnp.float32) + b1
        h1 = jnp.maximum(h1, 0.0)
        h2 = jnp.dot(h1.astype(jnp.bfloat16), w2.astype(jnp.bfloat16),
                     preferred_element_type=jnp.float32) + b2
        h2 = jnp.maximum(h2, 0.0)
        return jnp.dot(h2.astype(jnp.bfloat16), w3.astype(jnp.bfloat16),
                       preferred_element_type=jnp.float32) + b3
    h1 = jnp.maximum(x @ w1 + b1, 0.0)
    h2 = jnp.maximum(h1 @ w2 + b2, 0.0)
    return h2 @ w3 + b3


if __name__ == "__main__":
    key = jax.random.PRNGKey(0)
    kp, kx = jax.random.split(key)

    params = init_params(kp)
    kparams = prepare_params(params)

    B = 64  # small test batch -> two grid steps of 32 rows (exercises pipelining)
    x = jax.random.normal(kx, (B, IN_F), jnp.float32)

    out = jax.block_until_ready(mlp_forward(x, kparams))
    assert out.shape == (B, OUT_F), out.shape

    ref_same_numerics = mlp_ref(x, params, bf16_dots=True)
    ref_f32 = mlp_ref(x, params, bf16_dots=False)
    assert jnp.allclose(out, ref_same_numerics, atol=5e-3, rtol=5e-3), \
        "mismatch vs bf16-mirrored JAX reference"
    assert jnp.allclose(out, ref_f32, atol=5e-2, rtol=5e-2), \
        "mismatch vs f32 JAX reference"

    print("KERNEL_OK")
</pallas_src>

<mosaic_0001>
module attributes {stable_mosaic.version = 11 : i64} {
  func.func @_mlp_kernel(%arg0: i32, %arg1: memref<32x8xf32, #tpu.memory_space<vmem>>, %arg2: memref<8x128xbf16, #tpu.memory_space<vmem>>, %arg3: memref<1x128xf32, #tpu.memory_space<vmem>>, %arg4: memref<128x128xbf16, #tpu.memory_space<vmem>>, %arg5: memref<1x128xf32, #tpu.memory_space<vmem>>, %arg6: memref<128x51xbf16, #tpu.memory_space<vmem>>, %arg7: memref<1x51xf32, #tpu.memory_space<vmem>>, %arg8: memref<32x51xf32, #tpu.memory_space<vmem>>) attributes {dimension_semantics = [#tpu.dimension_semantics<parallel>], iteration_bounds = array<i64: 2>, scalar_prefetch = 0 : i64, scratch_operands = 0 : i64, tpu.core_type = #tpu.core_type<tc>, window_params = [{transform_indices = @transform_0, window_bounds = array<i64: 32, 8>}, {pipeline_mode = #tpu.pipeline_mode<synchronous>, transform_indices = @transform_1, window_bounds = array<i64: 8, 128>}, {pipeline_mode = #tpu.pipeline_mode<synchronous>, transform_indices = @transform_2, window_bounds = array<i64: 1, 128>}, {pipeline_mode = #tpu.pipeline_mode<synchronous>, transform_indices = @transform_3, window_bounds = array<i64: 128, 128>}, {pipeline_mode = #tpu.pipeline_mode<synchronous>, transform_indices = @transform_4, window_bounds = array<i64: 1, 128>}, {pipeline_mode = #tpu.pipeline_mode<synchronous>, transform_indices = @transform_5, window_bounds = array<i64: 128, 51>}, {pipeline_mode = #tpu.pipeline_mode<synchronous>, transform_indices = @transform_6, window_bounds = array<i64: 1, 51>}, {transform_indices = @transform_7, window_bounds = array<i64: 32, 51>}]} {
    %c0 = arith.constant 0 : index
    %c0_0 = arith.constant 0 : index
    %0 = vector.load %arg1[%c0, %c0_0] : memref<32x8xf32, #tpu.memory_space<vmem>>, vector<32x8xf32>
    %1 = arith.truncf %0 : vector<32x8xf32> to vector<32x8xbf16>
    %c0_1 = arith.constant 0 : index
    %c0_2 = arith.constant 0 : index
    %2 = vector.load %arg2[%c0_1, %c0_2] : memref<8x128xbf16, #tpu.memory_space<vmem>>, vector<8x128xbf16>
    %cst = arith.constant dense<0.000000e+00> : vector<32x128xf32>
    %3 = tpu.matmul %1, %2, %cst {dimension_numbers = #tpu.dot_dimension_numbers<[1], [0], [0], [1], [0, 0, 1, 1], [], []>} : vector<32x8xbf16>, vector<8x128xbf16>, vector<32x128xf32> -> vector<32x128xf32>
    %c0_3 = arith.constant 0 : index
    %c0_4 = arith.constant 0 : index
    %4 = vector.load %arg3[%c0_3, %c0_4] : memref<1x128xf32, #tpu.memory_space<vmem>>, vector<1x128xf32>
    %5 = vector.broadcast %4 : vector<1x128xf32> to vector<32x128xf32>
    %6 = arith.addf %3, %5 : vector<32x128xf32>
    %cst_5 = arith.constant 0.000000e+00 : f32
    %7 = vector.broadcast %cst_5 : f32 to vector<32x128xf32>
    %8 = arith.maximumf %6, %7 : vector<32x128xf32>
    %9 = arith.truncf %8 : vector<32x128xf32> to vector<32x128xbf16>
    %c0_6 = arith.constant 0 : index
    %c0_7 = arith.constant 0 : index
    %10 = vector.load %arg4[%c0_6, %c0_7] : memref<128x128xbf16, #tpu.memory_space<vmem>>, vector<128x128xbf16>
    %cst_8 = arith.constant dense<0.000000e+00> : vector<32x128xf32>
    %11 = tpu.matmul %9, %10, %cst_8 {dimension_numbers = #tpu.dot_dimension_numbers<[1], [0], [0], [1], [0, 0, 1, 1], [], []>} : vector<32x128xbf16>, vector<128x128xbf16>, vector<32x128xf32> -> vector<32x128xf32>
    %c0_9 = arith.constant 0 : index
    %c0_10 = arith.constant 0 : index
    %12 = vector.load %arg5[%c0_9, %c0_10] : memref<1x128xf32, #tpu.memory_space<vmem>>, vector<1x128xf32>
    %13 = vector.broadcast %12 : vector<1x128xf32> to vector<32x128xf32>
    %14 = arith.addf %11, %13 : vector<32x128xf32>
    %cst_11 = arith.constant 0.000000e+00 : f32
    %15 = vector.broadcast %cst_11 : f32 to vector<32x128xf32>
    %16 = arith.maximumf %14, %15 : vector<32x128xf32>
    %17 = arith.truncf %16 : vector<32x128xf32> to vector<32x128xbf16>
    %c0_12 = arith.constant 0 : index
    %c0_13 = arith.constant 0 : index
    %18 = vector.load %arg6[%c0_12, %c0_13] : memref<128x51xbf16, #tpu.memory_space<vmem>>, vector<128x51xbf16>
    %cst_14 = arith.constant dense<0.000000e+00> : vector<32x51xf32>
    %19 = tpu.matmul %17, %18, %cst_14 {dimension_numbers = #tpu.dot_dimension_numbers<[1], [0], [0], [1], [0, 0, 1, 1], [], []>} : vector<32x128xbf16>, vector<128x51xbf16>, vector<32x51xf32> -> vector<32x51xf32>
    %c0_15 = arith.constant 0 : index
    %c0_16 = arith.constant 0 : index
    %20 = vector.load %arg7[%c0_15, %c0_16] : memref<1x51xf32, #tpu.memory_space<vmem>>, vector<1x51xf32>
    %21 = vector.broadcast %20 : vector<1x51xf32> to vector<32x51xf32>
    %22 = arith.addf %19, %21 : vector<32x51xf32>
    %c0_17 = arith.constant 0 : index
    %c0_18 = arith.constant 0 : index
    %23 = vector.load %arg8[%c0_17, %c0_18] : memref<32x51xf32, #tpu.memory_space<vmem>>, vector<32x51xf32>
    tpu.vector_store %arg8[%c0_17, %c0_18], %22 {strides = array<i32>} : memref<32x51xf32, #tpu.memory_space<vmem>>, vector<32x51xf32>,
    return
  }
  func.func @transform_0(%arg0: i32) -> (i32, i32) {
    %c0_i32 = arith.constant 0 : i32
    %c0_i32_0 = arith.constant 0 : i32
    return %arg0, %c0_i32 : i32, i32
  }
  func.func @transform_1(%arg0: i32) -> (i32, i32) {
    %c0_i32 = arith.constant 0 : i32
    %c0_i32_0 = arith.constant 0 : i32
    %c0_i32_1 = arith.constant 0 : i32
    return %c0_i32, %c0_i32_0 : i32, i32
  }
  func.func @transform_2(%arg0: i32) -> (i32, i32) {
    %c0_i32 = arith.constant 0 : i32
    %c0_i32_0 = arith.constant 0 : i32
    %c0_i32_1 = arith.constant 0 : i32
    return %c0_i32, %c0_i32_0 : i32, i32
  }
  func.func @transform_3(%arg0: i32) -> (i32, i32) {
    %c0_i32 = arith.constant 0 : i32
    %c0_i32_0 = arith.constant 0 : i32
    %c0_i32_1 = arith.constant 0 : i32
    return %c0_i32, %c0_i32_0 : i32, i32
  }
  func.func @transform_4(%arg0: i32) -> (i32, i32) {
    %c0_i32 = arith.constant 0 : i32
    %c0_i32_0 = arith.constant 0 : i32
    %c0_i32_1 = arith.constant 0 : i32
    return %c0_i32, %c0_i32_0 : i32, i32
  }
  func.func @transform_5(%arg0: i32) -> (i32, i32) {
    %c0_i32 = arith.constant 0 : i32
    %c0_i32_0 = arith.constant 0 : i32
    %c0_i32_1 = arith.constant 0 : i32
    return %c0_i32, %c0_i32_0 : i32, i32
  }
  func.func @transform_6(%arg0: i32) -> (i32, i32) {
    %c0_i32 = arith.constant 0 : i32
    %c0_i32_0 = arith.constant 0 : i32
    %c0_i32_1 = arith.constant 0 : i32
    return %c0_i32, %c0_i32_0 : i32, i32
  }
  func.func @transform_7(%arg0: i32) -> (i32, i32) {
    %c0_i32 = arith.constant 0 : i32
    %c0_i32_0 = arith.constant 0 : i32
    return %arg0, %c0_i32 : i32, i32
  }
}

</mosaic_0001>

<llo_original>
// kernel: mlp_forward.1
$region0: #{mlp_forward.1}
  #allocation0 [shape = 'u32[]', space=smem, size = 0x4, offset = 0x4, fixed_abs, tag = 'smem constant byte address 0x4 - core index']
  #allocation1 [shape = 'u32[144,128]{1,0:T(1,128)}', space=vmem, size = 0x12000, scoped, tag = 'internal scratch']
  %s0 = inlined_call_operand.vmem [shape: f32[64,8], index: 0, kind: input, shape index: {}]
  %s1 = inlined_call_operand.vmem [shape: bf16[8,128], index: 1, kind: input, shape index: {}]
  %s2 = inlined_call_operand.vmem [shape: f32[1,128], index: 2, kind: input, shape index: {}]
  %s3 = inlined_call_operand.vmem [shape: bf16[128,128], index: 3, kind: input, shape index: {}]
  %s4 = inlined_call_operand.vmem [shape: f32[1,128], index: 4, kind: input, shape index: {}]
  %s5 = inlined_call_operand.vmem [shape: bf16[128,51], index: 5, kind: input, shape index: {}]
  %s6 = inlined_call_operand.vmem [shape: f32[1,51], index: 6, kind: input, shape index: {}]
  %s7 = inlined_call_operand.vmem [shape: f32[64,51], index: 7, kind: output, shape index: {}]
  %s8 = sld [smem:[#allocation0]]
  $region61: #{mlp_forward.1} parent=0
    _
  %s10 = ssub.s32 1, %s8
  %s11 = scalar_select 0, %s10, %s8
  loop: start=0, step=1, limit=4
  $region2: #{mlp_forward.1} parent=0 // loop_pre_header
    _
  $region3: #{mlp_forward.1} parent=0 // loop_header
    %s13 = sphi 0, %s17
    %p14 = scmp.ge.s32.totalorder %s13, 4
    %s23 = sphi 0, %s25
    %s26 = sphi 0, %s23
    %s27 = sphi 0, %s26
    %s43 = sphi 0, %s27
    %s47 = sphi 0, %s47
    %s49 = sphi 0, %s47
    %s50 = sphi 0, %s49
    %s64 = sphi 0, %s50
    %s68 = sphi 0, %s68
    %s70 = sphi 0, %s68
    %s71 = sphi 0, %s70
    %s85 = sphi 0, %s71
    %s89 = sphi 0, %s89
    %s91 = sphi 0, %s89
    %s92 = sphi 0, %s91
    %s106 = sphi 0, %s92
    %s110 = sphi 0, %s110
    %s112 = sphi 0, %s110
    %s113 = sphi 0, %s112
    %s127 = sphi 0, %s113
    %s131 = sphi 0, %s131
    %s133 = sphi 0, %s131
    %s134 = sphi 0, %s133
    %s148 = sphi 0, %s134
    %s152 = sphi 0, %s152
    %s154 = sphi 0, %s152
    %s155 = sphi 0, %s154
    %s169 = sphi 0, %s155
    %s175 = sphi 0, %s177
    %s178 = sphi 0, %s175
    %s179 = sphi 0, %s178
    %s195 = sphi 0, %s179
  $region4: #{mlp_forward.1} parent=0 // loop_header_branch
    %16 = sbr.rel (%p14) target = $region8
  $region5: #{mlp_forward.1} parent=0 // loop_body
    %s18 = ssub.s32 %s13, 1
    %s19 = ssub.s32 %s13, 2
    %s20 = sadd.s32 %s13, 1
    %s21 = ssub.s32 %s13, %s20
    %p22 = scmp.eq.s32.totalorder %s21, 0
    %s24 = sadd.s32 %s23, 1
    %s25 = scalar_select %p22, %s23, %s24
    %p28 = pneg %p22
    %p29 = scmp.eq.s32.totalorder %s13, 1
    %p30 = por %p28, %p29
    %p31 = scmp.ne.s32.totalorder %s23, %s26
    %p32 = scmp.eq.s32.totalorder %s13, 0
    %p33 = por %p31, %p32
    %p34 = scmp.ne.s32.totalorder %s23, %s26
    %p35 = scmp.eq.s32.totalorder %s18, 1
    %p36 = por %p34, %p35
    %p37 = scmp.ne.s32.totalorder %s26, %s27
    %p38 = scmp.eq.s32.totalorder %s18, 0
    %p39 = por %p37, %p38
    %p40 = scmp.ne.s32.totalorder %s26, %s27
    %p41 = scmp.eq.s32.totalorder %s19, 1
    %p42 = por %p40, %p41
    %p44 = scmp.ne.s32.totalorder %s27, %s43
    %p45 = scmp.eq.s32.totalorder %s19, 0
    %p46 = por %p44, %p45
    %s48 = sadd.s32 %s47, 1
    %p51 = scmp.eq.s32.totalorder %s13, 1
    %p52 = scmp.ne.s32.totalorder %s47, %s49
    %p53 = scmp.eq.s32.totalorder %s13, 0
    %p54 = por %p52, %p53
    %p55 = scmp.ne.s32.totalorder %s47, %s49
    %p56 = scmp.eq.s32.totalorder %s18, 1
    %p57 = por %p55, %p56
    %p58 = scmp.ne.s32.totalorder %s49, %s50
    %p59 = scmp.eq.s32.totalorder %s18, 0
    %p60 = por %p58, %p59
    %p61 = scmp.ne.s32.totalorder %s49, %s50
    %p62 = scmp.eq.s32.totalorder %s19, 1
    %p63 = por %p61, %p62
    %p65 = scmp.ne.s32.totalorder %s50, %s64
    %p66 = scmp.eq.s32.totalorder %s19, 0
    %p67 = por %p65, %p66
    %s69 = sadd.s32 %s68, 1
    %p72 = scmp.eq.s32.totalorder %s13, 1
    %p73 = scmp.ne.s32.totalorder %s68, %s70
    %p74 = scmp.eq.s32.totalorder %s13, 0
    %p75 = por %p73, %p74
    %p76 = scmp.ne.s32.totalorder %s68, %s70
    %p77 = scmp.eq.s32.totalorder %s18, 1
    %p78 = por %p76, %p77
    %p79 = scmp.ne.s32.totalorder %s70, %s71
    %p80 = scmp.eq.s32.totalorder %s18, 0
    %p81 = por %p79, %p80
    %p82 = scmp.ne.s32.totalorder %s70, %s71
    %p83 = scmp.eq.s32.totalorder %s19, 1
    %p84 = por %p82, %p83
    %p86 = scmp.ne.s32.totalorder %s71, %s85
    %p87 = scmp.eq.s32.totalorder %s19, 0
    %p88 = por %p86, %p87
    %s90 = sadd.s32 %s89, 1
    %p93 = scmp.eq.s32.totalorder %s13, 1
    %p94 = scmp.ne.s32.totalorder %s89, %s91
    %p95 = scmp.eq.s32.totalorder %s13, 0
    %p96 = por %p94, %p95
    %p97 = scmp.ne.s32.totalorder %s89, %s91
    %p98 = scmp.eq.s32.totalorder %s18, 1
    %p99 = por %p97, %p98
    %p100 = scmp.ne.s32.totalorder %s91, %s92
    %p101 = scmp.eq.s32.totalorder %s18, 0
    %p102 = por %p100, %p101
    %p103 = scmp.ne.s32.totalorder %s91, %s92
    %p104 = scmp.eq.s32.totalorder %s19, 1
    %p105 = por %p103, %p104
    %p107 = scmp.ne.s32.totalorder %s92, %s106
    %p108 = scmp.eq.s32.totalorder %s19, 0
    %p109 = por %p107, %p108
    %s111 = sadd.s32 %s110, 1
    %p114 = scmp.eq.s32.totalorder %s13, 1
    %p115 = scmp.ne.s32.totalorder %s110, %s112
    %p116 = scmp.eq.s32.totalorder %s13, 0
    %p117 = por %p115, %p116
    %p118 = scmp.ne.s32.totalorder %s110, %s112
    %p119 = scmp.eq.s32.totalorder %s18, 1
    %p120 = por %p118, %p119
    %p121 = scmp.ne.s32.totalorder %s112, %s113
    %p122 = scmp.eq.s32.totalorder %s18, 0
    %p123 = por %p121, %p122
    %p124 = scmp.ne.s32.totalorder %s112, %s113
    %p125 = scmp.eq.s32.totalorder %s19, 1
    %p126 = por %p124, %p125
    %p128 = scmp.ne.s32.totalorder %s113, %s127
    %p129 = scmp.eq.s32.totalorder %s19, 0
    %p130 = por %p128, %p129
    %s132 = sadd.s32 %s131, 1
    %p135 = scmp.eq.s32.totalorder %s13, 1
    %p136 = scmp.ne.s32.totalorder %s131, %s133
    %p137 = scmp.eq.s32.totalorder %s13, 0
    %p138 = por %p136, %p137
    %p139 = scmp.ne.s32.totalorder %s131, %s133
    %p140 = scmp.eq.s32.totalorder %s18, 1
    %p141 = por %p139, %p140
    %p142 = scmp.ne.s32.totalorder %s133, %s134
    %p143 = scmp.eq.s32.totalorder %s18, 0
    %p144 = por %p142, %p143
    %p145 = scmp.ne.s32.totalorder %s133, %s134
    %p146 = scmp.eq.s32.totalorder %s19, 1
    %p147 = por %p145, %p146
    %p149 = scmp.ne.s32.totalorder %s134, %s148
    %p150 = scmp.eq.s32.totalorder %s19, 0
    %p151 = por %p149, %p150
    %s153 = sadd.s32 %s152, 1
    %p156 = scmp.eq.s32.totalorder %s13, 1
    %p157 = scmp.ne.s32.totalorder %s152, %s154
    %p158 = scmp.eq.s32.totalorder %s13, 0
    %p159 = por %p157, %p158
    %p160 = scmp.ne.s32.totalorder %s152, %s154
    %p161 = scmp.eq.s32.totalorder %s18, 1
    %p162 = por %p160, %p161
    %p163 = scmp.ne.s32.totalorder %s154, %s155
    %p164 = scmp.eq.s32.totalorder %s18, 0
    %p165 = por %p163, %p164
    %p166 = scmp.ne.s32.totalorder %s154, %s155
    %p167 = scmp.eq.s32.totalorder %s19, 1
    %p168 = por %p166, %p167
    %p170 = scmp.ne.s32.totalorder %s155, %s169
    %p171 = scmp.eq.s32.totalorder %s19, 0
    %p172 = por %p170, %p171
    %s173 = ssub.s32 %s13, %s20
    %p174 = scmp.eq.s32.totalorder %s173, 0
    %s176 = sadd.s32 %s175, 1
    %s177 = scalar_select %p174, %s175, %s176
    %p180 = pneg %p174
    %p181 = scmp.eq.s32.totalorder %s13, 1
    %p182 = por %p180, %p181
    %p183 = scmp.ne.s32.totalorder %s175, %s178
    %p184 = scmp.eq.s32.totalorder %s13, 0
    %p185 = por %p183, %p184
    %p186 = scmp.ne.s32.totalorder %s175, %s178
    %p187 = scmp.eq.s32.totalorder %s18, 1
    %p188 = por %p186, %p187
    %p189 = scmp.ne.s32.totalorder %s178, %s179
    %p190 = scmp.eq.s32.totalorder %s18, 0
    %p191 = por %p189, %p190
    %p192 = scmp.ne.s32.totalorder %s178, %s179
    %p193 = scmp.eq.s32.totalorder %s19, 1
    %p194 = por %p192, %p193
    %p196 = scmp.ne.s32.totalorder %s179, %s195
    %p197 = scmp.eq.s32.totalorder %s19, 0
    %p198 = por %p196, %p197
    %p199 = scmp.le.s32.totalorder 1, %s13
    %p200 = scmp.lt.s32.totalorder %s13, 3
    %p201 = pnand %p199, %p200
    %p202 = pneg %p201
    // Predicated region
    $region9: #{mlp_forward.1} parent=5 // pred_check
      _
    $region10: #{mlp_forward.1} parent=5 // pred_check_branch
      %204 = sbr.rel (%p201) target = $region12
    $region11: #{mlp_forward.1} parent=5 // pred_region
      %s205 = ssub.s32 %s13, 1
      // Predicated region
      $region13: #{mlp_forward.1} parent=11 // pred_check
        %p206 = pneg %p60
      $region14: #{mlp_forward.1} parent=11 // pred_check_branch
        %208 = sbr.rel (%p206) target = $region16
      $region15: #{mlp_forward.1} parent=11 // pred_region
        _
      $region16: #{mlp_forward.1} parent=11 // pred_fallthru
        _
      // Predicated region
      $region17: #{mlp_forward.1} parent=11 // pred_check
        %p209 = pneg %p81
      $region18: #{mlp_forward.1} parent=11 // pred_check_branch
        %211 = sbr.rel (%p209) target = $region20
      $region19: #{mlp_forward.1} parent=11 // pred_region
        _
      $region20: #{mlp_forward.1} parent=11 // pred_fallthru
        _
      // Predicated region
      $region21: #{mlp_forward.1} parent=11 // pred_check
        %p212 = pneg %p102
      $region22: #{mlp_forward.1} parent=11 // pred_check_branch
        %214 = sbr.rel (%p212) target = $region24
      $region23: #{mlp_forward.1} parent=11 // pred_region
        _
      $region24: #{mlp_forward.1} parent=11 // pred_fallthru
        _
      // Predicated region
      $region25: #{mlp_forward.1} parent=11 // pred_check
        %p215 = pneg %p123
      $region26: #{mlp_forward.1} parent=11 // pred_check_branch
        %217 = sbr.rel (%p215) target = $region28
      $region27: #{mlp_forward.1} parent=11 // pred_region
        _
      $region28: #{mlp_forward.1} parent=11 // pred_fallthru
        _
      // Predicated region
      $region29: #{mlp_forward.1} parent=11 // pred_check
        %p218 = pneg %p144
      $region30: #{mlp_forward.1} parent=11 // pred_check_branch
        %220 = sbr.rel (%p218) target = $region32
      $region31: #{mlp_forward.1} parent=11 // pred_region
        _
      $region32: #{mlp_forward.1} parent=11 // pred_fallthru
        _
      // Predicated region
      $region33: #{mlp_forward.1} parent=11 // pred_check
        %p221 = pneg %p165
      $region34: #{mlp_forward.1} parent=11 // pred_check_branch
        %223 = sbr.rel (%p221) target = $region36
      $region35: #{mlp_forward.1} parent=11 // pred_region
        _
      $region36: #{mlp_forward.1} parent=11 // pred_fallthru
        _
    $region12: #{mlp_forward.1} parent=5 // pred_fallthru
      _
    %p224 = scmp.lt.s32.totalorder %s13, 2
    // Predicated region
    $region37: #{mlp_forward.1} parent=5 // pred_check
      %p225 = pneg %p224
    $region38: #{mlp_forward.1} parent=5 // pred_check_branch
      %227 = sbr.rel (%p225) target = $region40
    $region39: #{mlp_forward.1} parent=5 // pred_region
      // Predicated region
      $region41: #{mlp_forward.1} parent=39 // pred_check
        %p228 = pneg %p33
      $region42: #{mlp_forward.1} parent=39 // pred_check_branch
        %230 = sbr.rel (%p228) target = $region44
      $region43: #{mlp_forward.1} parent=39 // pred_region
        %s231 = smul.u32 4, %s13
        %p232 = scmp.lt.s32.totalorder %s231, 7
        %s233 = scalar_select %p232, %s231, 7
        %s234 = smul.addr %s233, 8
        %s235 = scalar_lea.vmem %s0, %s234
        %s236 = smul.u32 4, %s13
      $region44: #{mlp_forward.1} parent=39 // pred_fallthru
        _
    $region40: #{mlp_forward.1} parent=5 // pred_fallthru
      _
    %p237 = scmp.le.s32.totalorder 1, %s13
    %p238 = scmp.lt.s32.totalorder %s13, 3
    %p239 = pnand %p237, %p238
    %p240 = pneg %p239
    // Predicated region
    $region45: #{mlp_forward.1} parent=5 // pred_check
      _
    $region46: #{mlp_forward.1} parent=5 // pred_check_branch
      %242 = sbr.rel (%p239) target = $region48
    $region47: #{mlp_forward.1} parent=5 // pred_region
      %s243 = ssub.s32 %s13, 1
      %s244 = smul.u32 4, %s18
      %p245 = scmp.lt.s32.totalorder %s244, 7
      %s246 = scalar_select %p245, %s244, 7
      %s247 = smul.addr %s246, 8
      %s248 = scalar_lea.vmem %s0, %s247
      %p249 = pneg %p39
      %p250 = pneg %p36
      %p251 = pneg %p60
      %p252 = pneg %p57
      %p253 = pneg %p81
      %p254 = pneg %p78
      %p255 = pneg %p102
      %p256 = pneg %p99
      %p257 = pneg %p123
      %p258 = pneg %p120
      %p259 = pneg %p144
      %p260 = pneg %p141
      %p261 = pneg %p165
      %p262 = pneg %p162
      %p263 = pneg %p191
      %p264 = pneg %p188
      %s265 = smul.u32 4, %s18
      %p266 = scmp.lt.s32.totalorder %s265, 7
      %s267 = scalar_select %p266, %s265, 7
      %s268 = smul.addr %s267, 8
      %s269 = scalar_lea.vmem %s7, %s268
      %s270 = smul.u32 4, %s18
      %p271 = scmp.lt.s32.totalorder %s270, 7
      %s272 = scalar_select %p271, %s270, 7
      %s273 = smul.addr %s272, 8
      %s274 = scalar_lea.vmem %s0, %s273
      %s275 = smul.u32 4, %s18
      %s276 = smul.u32 4, %s18
      %p277 = scmp.lt.s32.totalorder %s276, 7
      %s278 = scalar_select %p277, %s276, 7
      %s279 = smul.addr %s278, 8
      %s280 = scalar_lea.vmem %s7, %s279
      %s281 = smul.u32 4, %s18
      %v283 = vld [vmem:[%s274] sm:$0xff]
      %v284 = vld [vmem:[%s274 + $0x8] sm:$0xff]
      %v285 = vld [vmem:[%s274 + $0x10] sm:$0xff]
      %v286 = vld [vmem:[%s274 + $0x18] sm:$0xff]
      %v287 = vpack.c.bf16 %v284, %v283
      %v288 = vpack.c.bf16 %v286, %v285
      %v289 = vld [vmem:[%s1] sm:$0xf]
      %v290 = vld [vmem:[%s2] sm:$0x1]
      %v292 = vlaneseq
      %v293 = vshrl.u32 %v292, 7
      %v294 = vsub.s32 0, %v293
      %v295 = vrot.slane %v290, %v294
      %vm297 = vcmask 64512
      %v299 = vsel %vm297, %v287, 0
      %v302 = vsel %vm297, %v288, 0
      %vm304 = vcmask 1043456
      %v306 = vsel %vm304, %v289, 0
      %308 = vmatprep.subr.bf16.mxu0 0
      %309 = vmatpush1.bf16.msra.mxu0 %v306
      %310 = vmatprep.subr.bf16.mxu0 0
      %311 = vmatpush1.bf16.msra.mxu0 0
      %312 = vmatprep.subr.bf16.mxu0 0
      %313 = vmatpush1.bf16.msra.mxu0 0
      %314 = vmatprep.subr.bf16.mxu0 0
      %315 = vmatpush1.bf16.msra.mxu0 0
      %316 = vmatprep.subr.bf16.mxu0 0
      %317 = vmatpush1.bf16.msra.mxu0 0
      %318 = vmatprep.subr.bf16.mxu0 0
      %319 = vmatpush1.bf16.msra.mxu0 0
      %320 = vmatprep.subr.bf16.mxu0 0
      %321 = vmatpush1.bf16.msra.mxu0 0
      %322 = vmatprep.subr.bf16.mxu0 0
      %323 = vmatpush1.bf16.msra.mxu0 0
      %324 = vmatprep.subr.bf16.mxu0 0
      %325 = vmatpush1.bf16.msra.mxu0 0
      %326 = vmatprep.subr.bf16.mxu0 0
      %327 = vmatpush1.bf16.msra.mxu0 0
      %328 = vmatprep.subr.bf16.mxu0 0
      %329 = vmatpush1.bf16.msra.mxu0 0
      %330 = vmatprep.subr.bf16.mxu0 0
      %331 = vmatpush1.bf16.msra.mxu0 0
      %332 = vmatprep.subr.bf16.mxu0 0
      %333 = vmatpush1.bf16.msra.mxu0 0
      %334 = vmatprep.subr.bf16.mxu0 0
      %335 = vmatpush1.bf16.msra.mxu0 0
      %336 = vmatprep.subr.bf16.mxu0 0
      %337 = vmatpush1.bf16.msra.mxu0 0
      %338 = vmatprep.subr.bf16.mxu0 0
      %339 = vmatpush1.bf16.msra.mxu0 0
      %340 = vmatprep.mubr.bf16.mxu0 0
      %341 = vmatmul.mubr.bf16.gmra.mrb[0].mxu0 %v299
      %v342 = vpop.f32.mrb[0].mxu0
      %v343 = vadd.f32 %v295, %v342
      %v344 = vpop.f32.mrb[0].mxu0
      %v345 = vpop.f32.mrb[0].mxu0
      %v346 = vadd.f32 %v295, %v345
      %v347 = vpop.f32.mrb[0].mxu0
      %348 = vmatprep.mubr.bf16.mxu0 0
      %349 = vmatmul.mubr.bf16.gmra.mrb[0].mxu0 %v302
      %v350 = vpop.f32.mrb[0].mxu0
      %v351 = vadd.f32 %v295, %v350
      %v352 = vpop.f32.mrb[0].mxu0
      %v353 = vpop.f32.mrb[0].mxu0
      %v354 = vadd.f32 %v295, %v353
      %v355 = vpop.f32.mrb[0].mxu0
      %356 = vdwg.mxu0
      %v357 = vmax.f32 %v343, 0.0
      %v358 = vmax.f32 %v346, 0.0
      %v359 = vmax.f32 %v351, 0.0
      %v360 = vmax.f32 %v354, 0.0
      %v361 = vpack.c.bf16 %v358, %v357
      %v362 = vpack.c.bf16 %v360, %v359
      %v363 = vld [vmem:[%s3] sm:$0xf]
      %v364 = vld [vmem:[%s3 + $0x4] sm:$0xf]
      %v365 = vld [vmem:[%s3 + $0x8] sm:$0xf]
      %v366 = vld [vmem:[%s3 + $0xc] sm:$0xf]
      %v367 = vld [vmem:[%s3 + $0x10] sm:$0xf]
      %v368 = vld [vmem:[%s3 + $0x14] sm:$0xf]
      %v369 = vld [vmem:[%s3 + $0x18] sm:$0xf]
      %v370 = vld [vmem:[%s3 + $0x1c] sm:$0xf]
      %v371 = vld [vmem:[%s3 + $0x20] sm:$0xf]
      %v372 = vld [vmem:[%s3 + $0x24] sm:$0xf]
      %v373 = vld [vmem:[%s3 + $0x28] sm:$0xf]
      %v374 = vld [vmem:[%s3 + $0x2c] sm:$0xf]
      %v375 = vld [vmem:[%s3 + $0x30] sm:$0xf]
      %v376 = vld [vmem:[%s3 + $0x34] sm:$0xf]
      %v377 = vld [vmem:[%s3 + $0x38] sm:$0xf]
      %v378 = vld [vmem:[%s3 + $0x3c] sm:$0xf]
      %v379 = vld [vmem:[%s4] sm:$0x1]
      %v381 = vlaneseq
      %v382 = vshrl.u32 %v381, 7
      %v383 = vsub.s32 0, %v382
      %v384 = vrot.slane %v379, %v383
      %v402 = vunpack.c.l.b16 %v363
      %v403 = vunpack.c.l.b16 %v364
      %v404 = vunpack.c.l.b16 %v365
      %v405 = vunpack.c.l.b16 %v366
      %v406 = vunpack.c.l.b16 %v367
      %v407 = vunpack.c.l.b16 %v368
      %v408 = vunpack.c.l.b16 %v369
      %v409 = vunpack.c.l.b16 %v370
      %v410 = vunpack.c.l.b16 %v371
      %v411 = vunpack.c.l.b16 %v372
      %v412 = vunpack.c.l.b16 %v373
      %v413 = vunpack.c.l.b16 %v374
      %v414 = vunpack.c.l.b16 %v375
      %v415 = vunpack.c.l.b16 %v376
      %v416 = vunpack.c.l.b16 %v377
      %v417 = vunpack.c.l.b16 %v378
      %v418 = vpack.c.b16 %v403, %v402
      %v419 = vpack.c.b16 %v405, %v404
      %v420 = vpack.c.b16 %v407, %v406
      %v421 = vpack.c.b16 %v409, %v408
      %v422 = vpack.c.b16 %v411, %v410
      %v423 = vpack.c.b16 %v413, %v412
      %v424 = vpack.c.b16 %v415, %v414
      %v425 = vpack.c.b16 %v417, %v416
      %434 = vmatprep.subr.bf16.mxu0 0
      %435 = vmatpush1.bf16.msra.mxu0 %v418
      %436 = vmatprep.subr.bf16.mxu0 0
      %437 = vmatpush1.bf16.msra.mxu0 %v419
      %438 = vmatprep.subr.bf16.mxu0 0
      %439 = vmatpush1.bf16.msra.mxu0 %v420
      %440 = vmatprep.subr.bf16.mxu0 0
      %441 = vmatpush1.bf16.msra.mxu0 %v421
      %442 = vmatprep.subr.bf16.mxu0 0
      %443 = vmatpush1.bf16.msra.mxu0 %v422
      %444 = vmatprep.subr.bf16.mxu0 0
      %445 = vmatpush1.bf16.msra.mxu0 %v423
      %446 = vmatprep.subr.bf16.mxu0 0
      %447 = vmatpush1.bf16.msra.mxu0 %v424
      %448 = vmatprep.subr.bf16.mxu0 0
      %449 = vmatpush1.bf16.msra.mxu0 %v425
      %450 = vmatprep.subr.bf16.mxu0 0
      %451 = vmatpush1.bf16.msra.mxu0 0
      %452 = vmatprep.subr.bf16.mxu0 0
      %453 = vmatpush1.bf16.msra.mxu0 0
      %454 = vmatprep.subr.bf16.mxu0 0
      %455 = vmatpush1.bf16.msra.mxu0 0
      %456 = vmatprep.subr.bf16.mxu0 0
      %457 = vmatpush1.bf16.msra.mxu0 0
      %458 = vmatprep.subr.bf16.mxu0 0
      %459 = vmatpush1.bf16.msra.mxu0 0
      %460 = vmatprep.subr.bf16.mxu0 0
      %461 = vmatpush1.bf16.msra.mxu0 0
      %462 = vmatprep.subr.bf16.mxu0 0
      %463 = vmatpush1.bf16.msra.mxu0 0
      %464 = vmatprep.subr.bf16.mxu0 0
      %465 = vmatpush1.bf16.msra.mxu0 0
      %466 = vmatprep.mubr.bf16.mxu0 0
      %467 = vmatmul.mubr.bf16.gmra.mrb[0].mxu0 %v361
      %v468 = vpop.f32.mrb[0].mxu0
      %v469 = vadd.f32 %v384, %v468
      %v470 = vpop.f32.mrb[0].mxu0
      %v471 = vpop.f32.mrb[0].mxu0
      %v472 = vadd.f32 %v384, %v471
      %v473 = vpop.f32.mrb[0].mxu0
      %474 = vmatprep.mubr.bf16.mxu0 0
      %475 = vmatmul.mubr.bf16.gmra.mrb[0].mxu0 %v362
      %v476 = vpop.f32.mrb[0].mxu0
      %v477 = vadd.f32 %v384, %v476
      %v478 = vpop.f32.mrb[0].mxu0
      %v479 = vpop.f32.mrb[0].mxu0
      %v480 = vadd.f32 %v384, %v479
      %v481 = vpop.f32.mrb[0].mxu0
      %482 = vdwg.mxu0
      %v483 = vmax.f32 %v469, 0.0
      %v484 = vmax.f32 %v472, 0.0
      %v485 = vmax.f32 %v477, 0.0
      %v486 = vmax.f32 %v480, 0.0
      %v487 = vpack.c.bf16 %v484, %v483
      %v488 = vpack.c.bf16 %v486, %v485
      %v489 = vld [vmem:[%s5] sm:$0xf]
      %v490 = vld [vmem:[%s5 + $0x4] sm:$0xf]
      %v491 = vld [vmem:[%s5 + $0x8] sm:$0xf]
      %v492 = vld [vmem:[%s5 + $0xc] sm:$0xf]
      %v493 = vld [vmem:[%s5 + $0x10] sm:$0xf]
      %v494 = vld [vmem:[%s5 + $0x14] sm:$0xf]
      %v495 = vld [vmem:[%s5 + $0x18] sm:$0xf]
      %v496 = vld [vmem:[%s5 + $0x1c] sm:$0xf]
      %v497 = vld [vmem:[%s5 + $0x20] sm:$0xf]
      %v498 = vld [vmem:[%s5 + $0x24] sm:$0xf]
      %v499 = vld [vmem:[%s5 + $0x28] sm:$0xf]
      %v500 = vld [vmem:[%s5 + $0x2c] sm:$0xf]
      %v501 = vld [vmem:[%s5 + $0x30] sm:$0xf]
      %v502 = vld [vmem:[%s5 + $0x34] sm:$0xf]
      %v503 = vld [vmem:[%s5 + $0x38] sm:$0xf]
      %v504 = vld [vmem:[%s5 + $0x3c] sm:$0xf]
      %v505 = vld [vmem:[%s6] sm:$0x1]
      %v507 = vlaneseq
      %v508 = vshrl.u32 %v507, 7
      %v509 = vsub.s32 0, %v508
      %v510 = vrot.slane %v505, %v509
      %v528 = vunpack.c.l.b16 %v489
      %v529 = vunpack.c.l.b16 %v490
      %v530 = vunpack.c.l.b16 %v491
      %v531 = vunpack.c.l.b16 %v492
      %v532 = vunpack.c.l.b16 %v493
      %v533 = vunpack.c.l.b16 %v494
      %v534 = vunpack.c.l.b16 %v495
      %v535 = vunpack.c.l.b16 %v496
      %v536 = vunpack.c.l.b16 %v497
      %v537 = vunpack.c.l.b16 %v498
      %v538 = vunpack.c.l.b16 %v499
      %v539 = vunpack.c.l.b16 %v500
      %v540 = vunpack.c.l.b16 %v501
      %v541 = vunpack.c.l.b16 %v502
      %v542 = vunpack.c.l.b16 %v503
      %v543 = vunpack.c.l.b16 %v504
      %v544 = vpack.c.b16 %v529, %v528
      %v545 = vpack.c.b16 %v531, %v530
      %v546 = vpack.c.b16 %v533, %v532
      %v547 = vpack.c.b16 %v535, %v534
      %v548 = vpack.c.b16 %v537, %v536
      %v549 = vpack.c.b16 %v539, %v538
      %v550 = vpack.c.b16 %v541, %v540
      %v551 = vpack.c.b16 %v543, %v542
      %560 = vmatprep.subr.bf16.mxu0 0
      %561 = vmatpush1.bf16.msra.mxu0 %v544
      %562 = vmatprep.subr.bf16.mxu0 0
      %563 = vmatpush1.bf16.msra.mxu0 %v545
      %564 = vmatprep.subr.bf16.mxu0 0
      %565 = vmatpush1.bf16.msra.mxu0 %v546
      %566 = vmatprep.subr.bf16.mxu0 0
      %567 = vmatpush1.bf16.msra.mxu0 %v547
      %568 = vmatprep.subr.bf16.mxu0 0
      %569 = vmatpush1.bf16.msra.mxu0 %v548
      %570 = vmatprep.subr.bf16.mxu0 0
      %571 = vmatpush1.bf16.msra.mxu0 %v549
      %572 = vmatprep.subr.bf16.mxu0 0
      %573 = vmatpush1.bf16.msra.mxu0 %v550
      %574 = vmatprep.subr.bf16.mxu0 0
      %575 = vmatpush1.bf16.msra.mxu0 %v551
      %576 = vmatprep.subr.bf16.mxu0 0
      %577 = vmatpush1.bf16.msra.mxu0 0
      %578 = vmatprep.subr.bf16.mxu0 0
      %579 = vmatpush1.bf16.msra.mxu0 0
      %580 = vmatprep.subr.bf16.mxu0 0
      %581 = vmatpush1.bf16.msra.mxu0 0
      %582 = vmatprep.subr.bf16.mxu0 0
      %583 = vmatpush1.bf16.msra.mxu0 0
      %584 = vmatprep.subr.bf16.mxu0 0
      %585 = vmatpush1.bf16.msra.mxu0 0
      %586 = vmatprep.subr.bf16.mxu0 0
      %587 = vmatpush1.bf16.msra.mxu0 0
      %588 = vmatprep.subr.bf16.mxu0 0
      %589 = vmatpush1.bf16.msra.mxu0 0
      %590 = vmatprep.subr.bf16.mxu0 0
      %591 = vmatpush1.bf16.msra.mxu0 0
      %592 = vmatprep.mubr.bf16.mxu0 0
      %593 = vmatmul.mubr.bf16.gmra.mrb[0].mxu0 %v487
      %v594 = vpop.f32.mrb[0].mxu0
      %v595 = vadd.f32 %v510, %v594
      %v596 = vpop.f32.mrb[0].mxu0
      %v597 = vpop.f32.mrb[0].mxu0
      %v598 = vadd.f32 %v510, %v597
      %v599 = vpop.f32.mrb[0].mxu0
      %600 = vmatprep.mubr.bf16.mxu0 0
      %601 = vmatmul.mubr.bf16.gmra.mrb[0].mxu0 %v488
      %v602 = vpop.f32.mrb[0].mxu0
      %v603 = vadd.f32 %v510, %v602
      %v604 = vpop.f32.mrb[0].mxu0
      %v605 = vpop.f32.mrb[0].mxu0
      %v606 = vadd.f32 %v510, %v605
      %v607 = vpop.f32.mrb[0].mxu0
      %608 = vdwg.mxu0
      %vm609 = vcmask 416768
      %610 = vst.msk [vmem:[%s280] sm:$0xff] %vm609, %v595
      %611 = vst.msk [vmem:[%s280 + $0x8] sm:$0xff] %vm609, %v598
      %612 = vst.msk [vmem:[%s280 + $0x10] sm:$0xff] %vm609, %v603
      %613 = vst.msk [vmem:[%s280 + $0x18] sm:$0xff] %vm609, %v606
      %s614 = smul.u32 4, %s18
      %p615 = scmp.lt.s32.totalorder %s614, 7
      %s616 = scalar_select %p615, %s614, 7
      %s617 = smul.addr %s616, 8
      %s618 = scalar_lea.vmem %s7, %s617
      // Predicated region
      $region49: #{mlp_forward.1} parent=47 // pred_check
        %p619 = pneg %p188
      $region50: #{mlp_forward.1} parent=47 // pred_check_branch
        %621 = sbr.rel (%p619) target = $region52
      $region51: #{mlp_forward.1} parent=47 // pred_region
        %s622 = smul.u32 4, %s18
      $region52: #{mlp_forward.1} parent=47 // pred_fallthru
        _
    $region48: #{mlp_forward.1} parent=5 // pred_fallthru
      _
    %p623 = scmp.le.s32.totalorder 2, %s13
    // Predicated region
    $region53: #{mlp_forward.1} parent=5 // pred_check
      %p624 = pneg %p623
    $region54: #{mlp_forward.1} parent=5 // pred_check_branch
      %626 = sbr.rel (%p624) target = $region56
    $region55: #{mlp_forward.1} parent=5 // pred_region
      %s627 = ssub.s32 %s13, 2
      // Predicated region
      $region57: #{mlp_forward.1} parent=55 // pred_check
        %p628 = pneg %p194
      $region58: #{mlp_forward.1} parent=55 // pred_check_branch
        %630 = sbr.rel (%p628) target = $region60
      $region59: #{mlp_forward.1} parent=55 // pred_region
        %s631 = smul.u32 4, %s19
        %p632 = scmp.lt.s32.totalorder %s631, 7
        %s633 = scalar_select %p632, %s631, 7
        %s634 = smul.addr %s633, 8
        %s635 = scalar_lea.vmem %s7, %s634
      $region60: #{mlp_forward.1} parent=55 // pred_fallthru
        _
    $region56: #{mlp_forward.1} parent=5 // pred_fallthru
      _
  $region6: #{mlp_forward.1} parent=0 // loop_footer
    %s17 = sadd.s32 1, %s13
  $region7: #{mlp_forward.1} parent=0 // loop_footer_branch
    %12 = sbr.rel target = $region3
  $region8: #{mlp_forward.1} parent=0 // loop_exit
    _

</llo_original>
